<compile_context>
chip_gen: v7x
topology: tpu7x:2x2x1
jax: 0.10.0
libtpu: 0.0.40
codegen_flags: <defaults>
</compile_context>

<pallas_src>
import functools

import jax
import jax.numpy as jnp
from jax.experimental import pallas as pl
from jax.experimental.pallas import tpu as pltpu

NUM_LAYERS = 10


def _round_up(x, m):
    return (x + m - 1) // m * m


def _ffn_layer_kernel(x_ref, w1_ref, b1_ref, w2_ref, b2_ref, o_ref, h_ref, *,
                      compute_dtype):
    """One layer of the FFN stack per grid step along the layer axis.

    x_ref : (tm, Dm_p)        input row-tile (resident across layer axis)
    w1_ref: (1, Dm_p, Dff_p)  this layer's first projection (bf16)
    b1_ref: (1, 1, Dff_p)     bias (f32)
    w2_ref: (1, Dff_p, Dm_p)  second projection (bf16)
    b2_ref: (1, 1, Dm_p)      bias (f32)
    o_ref : (tm, Dm_p)        output row-tile (written on last layer)
    h_ref : (tm, Dm_p) f32    activation carry scratch
    """
    l = pl.program_id(1)

    @pl.when(l == 0)
    def _():
        h_ref[...] = x_ref[...].astype(jnp.float32)

    # ReLU / bias adds on VPU in f32 (v5e has no bf16 VPU); matmuls on MXU in bf16.
    h = jnp.maximum(h_ref[...], 0.0)
    hid = jnp.dot(h.astype(compute_dtype), w1_ref[0],
                  preferred_element_type=jnp.float32) + b1_ref[0]
    out = jnp.dot(hid.astype(compute_dtype), w2_ref[0],
                  preferred_element_type=jnp.float32) + b2_ref[0]
    h_ref[...] = out

    @pl.when(l == pl.num_programs(1) - 1)
    def _():
        o_ref[...] = out.astype(o_ref.dtype)


def encoder_feedforward(x, w1, b1, w2, b2, *, row_tile=None,
                        compute_dtype=jnp.bfloat16):
    """x: (B, S, D_model) f32.  Stacked params:
    w1 (L, D_model, D_ff), b1 (L, D_ff), w2 (L, D_ff, D_model), b2 (L, D_model)."""
    B, S, Dm = x.shape
    L, _, Dff = w1.shape
    M = B * S

    # Lane-dense padding of feature dims; zero padding is exact for ReLU + Linear.
    Dm_p = _round_up(Dm, 128)
    Dff_p = _round_up(Dff, 128)
    M_p = _round_up(M, 8)

    # Row tile: largest lane-friendly tile that still leaves >=2 row grid points
    # (v7x has 2 TensorCores; a single row grid point leaves one idle).
    if row_tile is None:
        tm = M_p
        for cand in (512, 256, 128, 64, 32, 16, 8):
            if cand < M_p and M_p % cand == 0:
                tm = cand
                break
    else:
        tm = row_tile
    M_p = _round_up(M_p, tm)

    # Host-side prep: flatten, pad, cast weights once to bf16 (halves DMA + VMEM).
    x2 = x.reshape(M, Dm)
    x_p = jnp.zeros((M_p, Dm_p), x.dtype).at[:M, :Dm].set(x2)
    w1_p = jnp.zeros((L, Dm_p, Dff_p), compute_dtype).at[:, :Dm, :Dff].set(
        w1.astype(compute_dtype))
    w2_p = jnp.zeros((L, Dff_p, Dm_p), compute_dtype).at[:, :Dff, :Dm].set(
        w2.astype(compute_dtype))
    b1_p = jnp.zeros((L, 1, Dff_p), jnp.float32).at[:, 0, :Dff].set(
        b1.astype(jnp.float32))
    b2_p = jnp.zeros((L, 1, Dm_p), jnp.float32).at[:, 0, :Dm].set(
        b2.astype(jnp.float32))

    # Scoped-VMEM budget: double-buffered x/out tiles + per-layer weight blocks,
    # plus the f32 carry and hidden intermediate, with ~25% headroom (cap 64 MiB = v7x).
    w_itemsize = jnp.dtype(compute_dtype).itemsize
    per_layer_w = (Dm_p * Dff_p + Dff_p * Dm_p) * w_itemsize + (Dff_p + Dm_p) * 4
    act_tile = tm * Dm_p * 4
    hid_tile = tm * Dff_p * 4
    vmem_need = 2 * (2 * act_tile + per_layer_w) + act_tile + 2 * hid_tile
    vmem_limit = int(min(max(vmem_need * 1.25, 8 << 20), 64 << 20))

    kernel = functools.partial(_ffn_layer_kernel, compute_dtype=compute_dtype)

    out_p = pl.pallas_call(
        kernel,
        out_shape=jax.ShapeDtypeStruct((M_p, Dm_p), x.dtype),
        grid_spec=pltpu.PrefetchScalarGridSpec(
            num_scalar_prefetch=0,
            grid=(M_p // tm, L),                       # layer (sequential) axis last
            in_specs=[
                pl.BlockSpec((tm, Dm_p), lambda i, l: (i, 0)),        # x row-tile
                pl.BlockSpec((1, Dm_p, Dff_p), lambda i, l: (l, 0, 0)),  # W1[l]
                pl.BlockSpec((1, 1, Dff_p), lambda i, l: (l, 0, 0)),     # b1[l]
                pl.BlockSpec((1, Dff_p, Dm_p), lambda i, l: (l, 0, 0)),  # W2[l]
                pl.BlockSpec((1, 1, Dm_p), lambda i, l: (l, 0, 0)),      # b2[l]
            ],
            out_specs=pl.BlockSpec((tm, Dm_p), lambda i, l: (i, 0)),
            scratch_shapes=[pltpu.VMEM((tm, Dm_p), jnp.float32)],      # activation carry
        ),
        compiler_params=pltpu.CompilerParams(
            dimension_semantics=("parallel", "arbitrary"),
            vmem_limit_bytes=vmem_limit,
        ),
    )(x_p, w1_p, b1_p, w2_p, b2_p)

    return out_p[:M, :Dm].reshape(B, S, Dm)


def encoder_feedforward_ref(x, w1, b1, w2, b2, compute_dtype=jnp.bfloat16):
    """Pure-JAX reference mirroring the kernel's bf16-matmul / f32-accumulate math."""
    B, S, Dm = x.shape
    h = x.reshape(B * S, Dm).astype(jnp.float32)
    for i in range(w1.shape[0]):
        h = jnp.maximum(h, 0.0)
        h = jnp.dot(h.astype(compute_dtype), w1[i].astype(compute_dtype),
                    preferred_element_type=jnp.float32) + b1[i].astype(jnp.float32)
        h = jnp.dot(h.astype(compute_dtype), w2[i].astype(compute_dtype),
                    preferred_element_type=jnp.float32) + b2[i].astype(jnp.float32)
    return h.reshape(B, S, Dm)


def init_params(key, num_layers, d_model, d_ff):
    """Deterministic PyTorch-Linear-style init (uniform +-1/sqrt(fan_in))."""
    ks = jax.random.split(key, 4)
    lim1 = 1.0 / jnp.sqrt(jnp.float32(d_model))
    lim2 = 1.0 / jnp.sqrt(jnp.float32(d_ff))
    w1 = jax.random.uniform(ks[0], (num_layers, d_model, d_ff), jnp.float32, -lim1, lim1)
    b1 = jax.random.uniform(ks[1], (num_layers, d_ff), jnp.float32, -lim1, lim1)
    w2 = jax.random.uniform(ks[2], (num_layers, d_ff, d_model), jnp.float32, -lim2, lim2)
    b2 = jax.random.uniform(ks[3], (num_layers, d_model), jnp.float32, -lim2, lim2)
    return w1, b1, w2, b2


if __name__ == "__main__":
    key = jax.random.PRNGKey(0)
    kx, kp = jax.random.split(key)

    B, S = 2, 8                 # batch, sequence
    D_MODEL = 32                # model_dimensionality
    D_FF = 64                   # feedforward_dimensionality

    x = jax.random.normal(kx, (B, S, D_MODEL), dtype=jnp.float32)
    w1, b1, w2, b2 = init_params(kp, NUM_LAYERS, D_MODEL, D_FF)

    out = encoder_feedforward(x, w1, b1, w2, b2)
    out = jax.block_until_ready(out)

    ref = encoder_feedforward_ref(x, w1, b1, w2, b2)
    assert out.shape == (B, S, D_MODEL)
    assert jnp.allclose(out, ref, atol=1e-3, rtol=1e-3), "mismatch vs JAX reference"

    print("KERNEL_OK")
</pallas_src>

<mosaic_0001>
module attributes {stable_mosaic.version = 11 : i64} {
  func.func @_ffn_layer_kernel(%arg0: i32, %arg1: i32, %arg2: memref<8x128xf32, #tpu.memory_space<vmem>>, %arg3: memref<1x128x128xbf16, #tpu.memory_space<vmem>>, %arg4: memref<1x1x128xf32, #tpu.memory_space<vmem>>, %arg5: memref<1x128x128xbf16, #tpu.memory_space<vmem>>, %arg6: memref<1x1x128xf32, #tpu.memory_space<vmem>>, %arg7: memref<8x128xf32, #tpu.memory_space<vmem>>, %arg8: memref<8x128xf32, #tpu.memory_space<vmem>>) attributes {dimension_semantics = [#tpu.dimension_semantics<parallel>, #tpu.dimension_semantics<arbitrary>], iteration_bounds = array<i64: 2, 10>, scalar_prefetch = 0 : i64, scratch_operands = 1 : i64, tpu.core_type = #tpu.core_type<tc>, window_params = [{transform_indices = @transform_0, window_bounds = array<i64: 8, 128>}, {transform_indices = @transform_1, window_bounds = array<i64: 1, 128, 128>}, {transform_indices = @transform_2, window_bounds = array<i64: 1, 1, 128>}, {transform_indices = @transform_3, window_bounds = array<i64: 1, 128, 128>}, {transform_indices = @transform_4, window_bounds = array<i64: 1, 1, 128>}, {transform_indices = @transform_5, window_bounds = array<i64: 8, 128>}]} {
    %c0_i32 = arith.constant 0 : i32
    %0 = arith.cmpi eq, %arg1, %c0_i32 : i32
    %1 = arith.extui %0 : i1 to i32
    %c0_i32_0 = arith.constant 0 : i32
    %2 = arith.cmpi ne, %1, %c0_i32_0 : i32
    scf.if %2 {
      %c0_19 = arith.constant 0 : index
      %c0_20 = arith.constant 0 : index
      %26 = vector.load %arg2[%c0_19, %c0_20] : memref<8x128xf32, #tpu.memory_space<vmem>>, vector<8x128xf32>
      %c0_21 = arith.constant 0 : index
      %c0_22 = arith.constant 0 : index
      %27 = vector.load %arg8[%c0_21, %c0_22] : memref<8x128xf32, #tpu.memory_space<vmem>>, vector<8x128xf32>
      tpu.vector_store %arg8[%c0_21, %c0_22], %26 {strides = array<i32>} : memref<8x128xf32, #tpu.memory_space<vmem>>, vector<8x128xf32>,
    } else {
    }
    %c0 = arith.constant 0 : index
    %c0_1 = arith.constant 0 : index
    %3 = vector.load %arg8[%c0, %c0_1] : memref<8x128xf32, #tpu.memory_space<vmem>>, vector<8x128xf32>
    %cst = arith.constant 0.000000e+00 : f32
    %4 = vector.broadcast %cst : f32 to vector<8x128xf32>
    %5 = arith.maximumf %3, %4 : vector<8x128xf32>
    %6 = arith.truncf %5 : vector<8x128xf32> to vector<8x128xbf16>
    %c0_2 = arith.constant 0 : index
    %c0_3 = arith.constant 0 : index
    %c0_4 = arith.constant 0 : index
    %7 = vector.load %arg3[%c0_2, %c0_3, %c0_4] : memref<1x128x128xbf16, #tpu.memory_space<vmem>>, vector<1x128x128xbf16>
    %8 = vector.shape_cast %7 : vector<1x128x128xbf16> to vector<128x128xbf16>
    %cst_5 = arith.constant dense<0.000000e+00> : vector<8x128xf32>
    %9 = tpu.matmul %6, %8, %cst_5 {dimension_numbers = #tpu.dot_dimension_numbers<[1], [0], [0], [1], [0, 0, 1, 1], [], []>} : vector<8x128xbf16>, vector<128x128xbf16>, vector<8x128xf32> -> vector<8x128xf32>
    %c0_6 = arith.constant 0 : index
    %c0_7 = arith.constant 0 : index
    %c0_8 = arith.constant 0 : index
    %10 = vector.load %arg4[%c0_6, %c0_7, %c0_8] : memref<1x1x128xf32, #tpu.memory_space<vmem>>, vector<1x1x128xf32>
    %11 = vector.shape_cast %10 : vector<1x1x128xf32> to vector<1x128xf32>
    %12 = vector.broadcast %11 : vector<1x128xf32> to vector<8x128xf32>
    %13 = arith.addf %9, %12 : vector<8x128xf32>
    %14 = arith.truncf %13 : vector<8x128xf32> to vector<8x128xbf16>
    %c0_9 = arith.constant 0 : index
    %c0_10 = arith.constant 0 : index
    %c0_11 = arith.constant 0 : index
    %15 = vector.load %arg5[%c0_9, %c0_10, %c0_11] : memref<1x128x128xbf16, #tpu.memory_space<vmem>>, vector<1x128x128xbf16>
    %16 = vector.shape_cast %15 : vector<1x128x128xbf16> to vector<128x128xbf16>
    %cst_12 = arith.constant dense<0.000000e+00> : vector<8x128xf32>
    %17 = tpu.matmul %14, %16, %cst_12 {dimension_numbers = #tpu.dot_dimension_numbers<[1], [0], [0], [1], [0, 0, 1, 1], [], []>} : vector<8x128xbf16>, vector<128x128xbf16>, vector<8x128xf32> -> vector<8x128xf32>
    %c0_13 = arith.constant 0 : index
    %c0_14 = arith.constant 0 : index
    %c0_15 = arith.constant 0 : index
    %18 = vector.load %arg6[%c0_13, %c0_14, %c0_15] : memref<1x1x128xf32, #tpu.memory_space<vmem>>, vector<1x1x128xf32>
    %19 = vector.shape_cast %18 : vector<1x1x128xf32> to vector<1x128xf32>
    %20 = vector.broadcast %19 : vector<1x128xf32> to vector<8x128xf32>
    %21 = arith.addf %17, %20 : vector<8x128xf32>
    %c0_16 = arith.constant 0 : index
    %c0_17 = arith.constant 0 : index
    %22 = vector.load %arg8[%c0_16, %c0_17] : memref<8x128xf32, #tpu.memory_space<vmem>>, vector<8x128xf32>
    tpu.vector_store %arg8[%c0_16, %c0_17], %21 {strides = array<i32>} : memref<8x128xf32, #tpu.memory_space<vmem>>, vector<8x128xf32>,
    %c9_i32 = arith.constant 9 : i32
    %23 = arith.cmpi eq, %arg1, %c9_i32 : i32
    %24 = arith.extui %23 : i1 to i32
    %c0_i32_18 = arith.constant 0 : i32
    %25 = arith.cmpi ne, %24, %c0_i32_18 : i32
    scf.if %25 {
      %c0_19 = arith.constant 0 : index
      %c0_20 = arith.constant 0 : index
      %26 = vector.load %arg7[%c0_19, %c0_20] : memref<8x128xf32, #tpu.memory_space<vmem>>, vector<8x128xf32>
      tpu.vector_store %arg7[%c0_19, %c0_20], %21 {strides = array<i32>} : memref<8x128xf32, #tpu.memory_space<vmem>>, vector<8x128xf32>,
    } else {
    }
    return
  }
  func.func @transform_0(%arg0: i32, %arg1: i32) -> (i32, i32) {
    %c0_i32 = arith.constant 0 : i32
    %c0_i32_0 = arith.constant 0 : i32
    return %arg0, %c0_i32 : i32, i32
  }
  func.func @transform_1(%arg0: i32, %arg1: i32) -> (i32, i32, i32) {
    %c0_i32 = arith.constant 0 : i32
    %c0_i32_0 = arith.constant 0 : i32
    %c0_i32_1 = arith.constant 0 : i32
    return %arg1, %c0_i32, %c0_i32_0 : i32, i32, i32
  }
  func.func @transform_2(%arg0: i32, %arg1: i32) -> (i32, i32, i32) {
    %c0_i32 = arith.constant 0 : i32
    %c0_i32_0 = arith.constant 0 : i32
    %c0_i32_1 = arith.constant 0 : i32
    return %arg1, %c0_i32, %c0_i32_0 : i32, i32, i32
  }
  func.func @transform_3(%arg0: i32, %arg1: i32) -> (i32, i32, i32) {
    %c0_i32 = arith.constant 0 : i32
    %c0_i32_0 = arith.constant 0 : i32
    %c0_i32_1 = arith.constant 0 : i32
    return %arg1, %c0_i32, %c0_i32_0 : i32, i32, i32
  }
  func.func @transform_4(%arg0: i32, %arg1: i32) -> (i32, i32, i32) {
    %c0_i32 = arith.constant 0 : i32
    %c0_i32_0 = arith.constant 0 : i32
    %c0_i32_1 = arith.constant 0 : i32
    return %arg1, %c0_i32, %c0_i32_0 : i32, i32, i32
  }
  func.func @transform_5(%arg0: i32, %arg1: i32) -> (i32, i32) {
    %c0_i32 = arith.constant 0 : i32
    %c0_i32_0 = arith.constant 0 : i32
    return %arg0, %c0_i32 : i32, i32
  }
}

</mosaic_0001>

<llo_original>
// kernel: tpu_custom_call.1
$region0: #{tpu_custom_call.1}
  #allocation0 [shape = 'u32[]', space=smem, size = 0x4, offset = 0x4, fixed_abs, tag = 'smem constant byte address 0x4 - core index']
  #allocation1 [shape = 'u32[144,128]{1,0:T(1,128)}', space=vmem, size = 0x12000, scoped, tag = 'internal scratch']
  #allocation2 [shape = 'f32[8,128]{1,0:T(8,128)}', space=vmem, size = 0x1000, scoped, tag = 'scratch operand']
  %s0 = inlined_call_operand.hbm [shape: f32[16,128], index: 0, kind: input, shape index: {}]
  %s1 = inlined_call_operand.hbm [shape: bf16[10,128,128], index: 1, kind: input, shape index: {}]
  %s2 = inlined_call_operand.hbm [shape: f32[10,1,128], index: 2, kind: input, shape index: {}]
  %s3 = inlined_call_operand.hbm [shape: bf16[10,128,128], index: 3, kind: input, shape index: {}]
  %s4 = inlined_call_operand.vmem [shape: f32[10,1,128], index: 4, kind: input, shape index: {}]
  %s5 = inlined_call_operand.hbm [shape: f32[16,128], index: 5, kind: output, shape index: {}]
  %s6 = sld [smem:[#allocation0]]
  $region77: #{tpu_custom_call.1} parent=0
    _
  %s8 = ssub.s32 1, %s6
  %s9 = scalar_select 0, %s8, %s6
  $region1: #{tpu_custom_call.1} parent=0
    #allocation3 [shape = 'u8[8192]{0}', space=vmem, size = 0x2000, scoped, tag = 'input window, operand 0']
    #allocation4 [shape = 's32[2]{0}', space=sflag, size = 0x8, scoped, tag = 'scoped memory for tpu_custom_call.1']
    #allocation5 [shape = 's32[2]{0}', space=sflag, size = 0x8, scoped, tag = 'scoped memory for tpu_custom_call.1']
    #allocation6 [shape = 'u8[65536]{0}', space=vmem, size = 0x10000, scoped, tag = 'input window, operand 1']
    #allocation7 [shape = 's32[2]{0}', space=sflag, size = 0x8, scoped, tag = 'scoped memory for tpu_custom_call.1']
    #allocation8 [shape = 'u8[1024]{0}', space=vmem, size = 0x400, scoped, tag = 'input window, operand 2']
    #allocation9 [shape = 'u8[65536]{0}', space=vmem, size = 0x10000, scoped, tag = 'input window, operand 3']
    #allocation10 [shape = 's32[2]{0}', space=sflag, size = 0x8, scoped, tag = 'scoped memory for tpu_custom_call.1']
    #allocation11 [shape = 'u8[8192]{0}', space=vmem, size = 0x2000, scoped, tag = 'output window, operand 0']
    %10 = vsyncpa [#allocation4], 0
    %s11 = scalar_lea.sflag [#allocation4], 1
    %12 = vsyncpa %s11, 0
    %13 = vsyncpa [#allocation7], 0
    %s14 = scalar_lea.sflag [#allocation7], 1
    %15 = vsyncpa %s14, 0
    %16 = vsyncpa [#allocation10], 0
    %s17 = scalar_lea.sflag [#allocation10], 1
    %18 = vsyncpa %s17, 0
    %19 = vsyncpa [#allocation5], 0
    %s20 = scalar_lea.sflag [#allocation5], 1
    %21 = vsyncpa %s20, 0
    loop: start=0, step=1, limit=22
    $region2: #{tpu_custom_call.1} parent=1 // loop_pre_header
      _
    $region3: #{tpu_custom_call.1} parent=1 // loop_header
      %s23 = sphi 0, %s27
      %p24 = scmp.ge.s32.totalorder %s23, 22
      %s30 = sphi 0, %s42
      %s31 = sphi 0, %s38
      %s32 = sphi 0, %s30
      %s33 = sphi 0, %s31
      %s34 = sphi 0, %s32
      %s35 = sphi 0, %s33
      %s45 = sphi 0, %s47
      %s48 = sphi 0, %s45
      %s49 = sphi 0, %s48
      %s65 = sphi 0, %s49
      %s71 = sphi 0, %s73
      %s74 = sphi 0, %s71
      %s75 = sphi 0, %s74
      %s91 = sphi 0, %s75
      %s97 = sphi 0, %s99
      %s100 = sphi 0, %s97
      %s101 = sphi 0, %s100
      %s117 = sphi 0, %s101
      %s123 = sphi 0, %s125
      %s126 = sphi 0, %s123
      %s127 = sphi 0, %s126
      %s143 = sphi 0, %s127
      %s149 = sphi 0, %s151
      %s152 = sphi 0, %s149
      %s153 = sphi 0, %s152
      %s169 = sphi 0, %s153
      %s175 = sphi 0, %s177
      %s178 = sphi 0, %s175
      %s179 = sphi 0, %s178
      %s195 = sphi 0, %s179
    $region4: #{tpu_custom_call.1} parent=1 // loop_header_branch
      %26 = sbr.rel (%p24) target = $region8
    $region5: #{tpu_custom_call.1} parent=1 // loop_body
      %s28 = ssub.s32 %s23, 1
      %s29 = ssub.s32 %s23, 2
      %s36 = sadd.s32 1, %s31
      %p37 = scmp.ge.s32.totalorder %s36, 10
      %s38 = scalar_select %p37, 0, %s36
      %s39 = sadd.s32 1, %s30
      %s40 = scalar_select %p37, %s39, %s30
      %p41 = scmp.ge.s32.totalorder %s40, 2
      %s42 = scalar_select %p41, 0, %s40
      %s43 = ssub.s32 %s30, %s42
      %p44 = scmp.eq.s32.totalorder %s43, 0
      %s46 = sadd.s32 %s45, 1
      %s47 = scalar_select %p44, %s45, %s46
      %p50 = pneg %p44
      %p51 = scmp.eq.s32.totalorder %s23, 19
      %p52 = por %p50, %p51
      %p53 = scmp.ne.s32.totalorder %s45, %s48
      %p54 = scmp.eq.s32.totalorder %s23, 0
      %p55 = por %p53, %p54
      %p56 = scmp.ne.s32.totalorder %s45, %s48
      %p57 = scmp.eq.s32.totalorder %s28, 19
      %p58 = por %p56, %p57
      %p59 = scmp.ne.s32.totalorder %s48, %s49
      %p60 = scmp.eq.s32.totalorder %s28, 0
      %p61 = por %p59, %p60
      %p62 = scmp.ne.s32.totalorder %s48, %s49
      %p63 = scmp.eq.s32.totalorder %s29, 19
      %p64 = por %p62, %p63
      %p66 = scmp.ne.s32.totalorder %s49, %s65
      %p67 = scmp.eq.s32.totalorder %s29, 0
      %p68 = por %p66, %p67
      %s69 = ssub.s32 %s31, %s38
      %p70 = scmp.eq.s32.totalorder %s69, 0
      %s72 = sadd.s32 %s71, 1
      %s73 = scalar_select %p70, %s71, %s72
      %p76 = pneg %p70
      %p77 = scmp.eq.s32.totalorder %s23, 19
      %p78 = por %p76, %p77
      %p79 = scmp.ne.s32.totalorder %s71, %s74
      %p80 = scmp.eq.s32.totalorder %s23, 0
      %p81 = por %p79, %p80
      %p82 = scmp.ne.s32.totalorder %s71, %s74
      %p83 = scmp.eq.s32.totalorder %s28, 19
      %p84 = por %p82, %p83
      %p85 = scmp.ne.s32.totalorder %s74, %s75
      %p86 = scmp.eq.s32.totalorder %s28, 0
      %p87 = por %p85, %p86
      %p88 = scmp.ne.s32.totalorder %s74, %s75
      %p89 = scmp.eq.s32.totalorder %s29, 19
      %p90 = por %p88, %p89
      %p92 = scmp.ne.s32.totalorder %s75, %s91
      %p93 = scmp.eq.s32.totalorder %s29, 0
      %p94 = por %p92, %p93
      %s95 = ssub.s32 %s31, %s38
      %p96 = scmp.eq.s32.totalorder %s95, 0
      %s98 = sadd.s32 %s97, 1
      %s99 = scalar_select %p96, %s97, %s98
      %p102 = pneg %p96
      %p103 = scmp.eq.s32.totalorder %s23, 19
      %p104 = por %p102, %p103
      %p105 = scmp.ne.s32.totalorder %s97, %s100
      %p106 = scmp.eq.s32.totalorder %s23, 0
      %p107 = por %p105, %p106
      %p108 = scmp.ne.s32.totalorder %s97, %s100
      %p109 = scmp.eq.s32.totalorder %s28, 19
      %p110 = por %p108, %p109
      %p111 = scmp.ne.s32.totalorder %s100, %s101
      %p112 = scmp.eq.s32.totalorder %s28, 0
      %p113 = por %p111, %p112
      %p114 = scmp.ne.s32.totalorder %s100, %s101
      %p115 = scmp.eq.s32.totalorder %s29, 19
      %p116 = por %p114, %p115
      %p118 = scmp.ne.s32.totalorder %s101, %s117
      %p119 = scmp.eq.s32.totalorder %s29, 0
      %p120 = por %p118, %p119
      %s121 = ssub.s32 %s31, %s38
      %p122 = scmp.eq.s32.totalorder %s121, 0
      %s124 = sadd.s32 %s123, 1
      %s125 = scalar_select %p122, %s123, %s124
      %p128 = pneg %p122
      %p129 = scmp.eq.s32.totalorder %s23, 19
      %p130 = por %p128, %p129
      %p131 = scmp.ne.s32.totalorder %s123, %s126
      %p132 = scmp.eq.s32.totalorder %s23, 0
      %p133 = por %p131, %p132
      %p134 = scmp.ne.s32.totalorder %s123, %s126
      %p135 = scmp.eq.s32.totalorder %s28, 19
      %p136 = por %p134, %p135
      %p137 = scmp.ne.s32.totalorder %s126, %s127
      %p138 = scmp.eq.s32.totalorder %s28, 0
      %p139 = por %p137, %p138
      %p140 = scmp.ne.s32.totalorder %s126, %s127
      %p141 = scmp.eq.s32.totalorder %s29, 19
      %p142 = por %p140, %p141
      %p144 = scmp.ne.s32.totalorder %s127, %s143
      %p145 = scmp.eq.s32.totalorder %s29, 0
      %p146 = por %p144, %p145
      %s147 = ssub.s32 %s31, %s38
      %p148 = scmp.eq.s32.totalorder %s147, 0
      %s150 = sadd.s32 %s149, 1
      %s151 = scalar_select %p148, %s149, %s150
      %p154 = pneg %p148
      %p155 = scmp.eq.s32.totalorder %s23, 19
      %p156 = por %p154, %p155
      %p157 = scmp.ne.s32.totalorder %s149, %s152
      %p158 = scmp.eq.s32.totalorder %s23, 0
      %p159 = por %p157, %p158
      %p160 = scmp.ne.s32.totalorder %s149, %s152
      %p161 = scmp.eq.s32.totalorder %s28, 19
      %p162 = por %p160, %p161
      %p163 = scmp.ne.s32.totalorder %s152, %s153
      %p164 = scmp.eq.s32.totalorder %s28, 0
      %p165 = por %p163, %p164
      %p166 = scmp.ne.s32.totalorder %s152, %s153
      %p167 = scmp.eq.s32.totalorder %s29, 19
      %p168 = por %p166, %p167
      %p170 = scmp.ne.s32.totalorder %s153, %s169
      %p171 = scmp.eq.s32.totalorder %s29, 0
      %p172 = por %p170, %p171
      %s173 = ssub.s32 %s30, %s42
      %p174 = scmp.eq.s32.totalorder %s173, 0
      %s176 = sadd.s32 %s175, 1
      %s177 = scalar_select %p174, %s175, %s176
      %p180 = pneg %p174
      %p181 = scmp.eq.s32.totalorder %s23, 19
      %p182 = por %p180, %p181
      %p183 = scmp.ne.s32.totalorder %s175, %s178
      %p184 = scmp.eq.s32.totalorder %s23, 0
      %p185 = por %p183, %p184
      %p186 = scmp.ne.s32.totalorder %s175, %s178
      %p187 = scmp.eq.s32.totalorder %s28, 19
      %p188 = por %p186, %p187
      %p189 = scmp.ne.s32.totalorder %s178, %s179
      %p190 = scmp.eq.s32.totalorder %s28, 0
      %p191 = por %p189, %p190
      %p192 = scmp.ne.s32.totalorder %s178, %s179
      %p193 = scmp.eq.s32.totalorder %s29, 19
      %p194 = por %p192, %p193
      %p196 = scmp.ne.s32.totalorder %s179, %s195
      %p197 = scmp.eq.s32.totalorder %s29, 0
      %p198 = por %p196, %p197
      %p199 = scmp.le.s32.totalorder 1, %s23
      %p200 = scmp.lt.s32.totalorder %s23, 21
      %p201 = pnand %p199, %p200
      %p202 = pneg %p201
      // Predicated region
      $region9: #{tpu_custom_call.1} parent=5 // pred_check
        _
      $region10: #{tpu_custom_call.1} parent=5 // pred_check_branch
        %204 = sbr.rel (%p201) target = $region12
      $region11: #{tpu_custom_call.1} parent=5 // pred_region
        %s205 = ssub.s32 %s23, 1
      $region12: #{tpu_custom_call.1} parent=5 // pred_fallthru
        _
      %p206 = scmp.lt.s32.totalorder %s23, 20
      // Predicated region
      $region13: #{tpu_custom_call.1} parent=5 // pred_check
        %p207 = pneg %p206
      $region14: #{tpu_custom_call.1} parent=5 // pred_check_branch
        %209 = sbr.rel (%p207) target = $region16
      $region15: #{tpu_custom_call.1} parent=5 // pred_region
        // Predicated region
        $region17: #{tpu_custom_call.1} parent=15 // pred_check
          %p210 = pneg %p55
        $region18: #{tpu_custom_call.1} parent=15 // pred_check_branch
          %212 = sbr.rel (%p210) target = $region20
        $region19: #{tpu_custom_call.1} parent=15 // pred_region
          %s213 = sand.u32 %s45, 1
          %s214 = scalar_lea.sflag [#allocation4], %s213
          %s215 = sand.u32 %s45, 1
          %s216 = smul.addr %s215, 8
          %s217 = scalar_lea.vmem [#allocation3], %s216
          %s219 = ssub.s32 128, 128
          %220 = vsyncadd %s214, %s219
          %s221 = smul.addr %s30, 128
          %s222 = scalar_lea.hbm %s0, %s221
          %s224 = sshll.u32 %s217, 4
          %s225 = int_to_ptr.vmem [resolvable:$true] %s224
          %227 = dma.hbm_to_vmem [thread:$0]  %s222, 128, %s225, %s214
        $region20: #{tpu_custom_call.1} parent=15 // pred_fallthru
          _
        // Predicated region
        $region21: #{tpu_custom_call.1} parent=15 // pred_check
          %p228 = pneg %p81
        $region22: #{tpu_custom_call.1} parent=15 // pred_check_branch
          %230 = sbr.rel (%p228) target = $region24
        $region23: #{tpu_custom_call.1} parent=15 // pred_region
          %s231 = sand.u32 %s23, 1
          %s232 = scalar_lea.sflag [#allocation7], %s231
          %s233 = sand.u32 %s71, 1
          %s234 = smul.addr %s233, 64
          %s235 = scalar_lea.vmem [#allocation6], %s234
          %s237 = ssub.s32 1024, 1024
          %238 = vsyncadd %s232, %s237
          %s239 = smul.addr %s31, 16
          %s240 = smul.addr %s239, 64
          %s241 = scalar_lea.hbm %s1, %s240
          %s242 = sshll.u32 %s235, 4
          %s243 = int_to_ptr.vmem [resolvable:$true] %s242
          %248 = dma.hbm_to_vmem [thread:$0]  %s241, 1024, %s243, %s232, 64, 64, 4
        $region24: #{tpu_custom_call.1} parent=15 // pred_fallthru
          _
        // Predicated region
        $region25: #{tpu_custom_call.1} parent=15 // pred_check
          %p249 = pneg %p107
        $region26: #{tpu_custom_call.1} parent=15 // pred_check_branch
          %251 = sbr.rel (%p249) target = $region28
        $region27: #{tpu_custom_call.1} parent=15 // pred_region
          %s252 = sand.u32 %s23, 1
          %s253 = scalar_lea.sflag [#allocation7], %s252
          %s254 = sand.u32 %s97, 1
          %s255 = scalar_lea.vmem [#allocation8], %s254
          %s257 = ssub.s32 16, 16
          %258 = vsyncadd %s253, %s257
          %s259 = smul.addr %s31, 16
          %s260 = scalar_lea.hbm %s2, %s259
          %s262 = sshll.u32 %s255, 4
          %s263 = int_to_ptr.vmem [resolvable:$true] %s262
          %265 = dma.hbm_to_vmem [thread:$0]  %s260, 16, %s263, %s253
        $region28: #{tpu_custom_call.1} parent=15 // pred_fallthru
          _
        // Predicated region
        $region29: #{tpu_custom_call.1} parent=15 // pred_check
          %p266 = pneg %p133
        $region30: #{tpu_custom_call.1} parent=15 // pred_check_branch
          %268 = sbr.rel (%p266) target = $region32
        $region31: #{tpu_custom_call.1} parent=15 // pred_region
          %s269 = sand.u32 %s123, 1
          %s270 = scalar_lea.sflag [#allocation10], %s269
          %s271 = sand.u32 %s123, 1
          %s272 = smul.addr %s271, 64
          %s273 = scalar_lea.vmem [#allocation9], %s272
          %s275 = ssub.s32 1024, 1024
          %276 = vsyncadd %s270, %s275
          %s277 = smul.addr %s31, 16
          %s278 = smul.addr %s277, 64
          %s279 = scalar_lea.hbm %s3, %s278
          %s280 = sshll.u32 %s273, 4
          %s281 = int_to_ptr.vmem [resolvable:$true] %s280
          %286 = dma.hbm_to_vmem [thread:$0]  %s279, 1024, %s281, %s270, 64, 64, 4
        $region32: #{tpu_custom_call.1} parent=15 // pred_fallthru
          _
        // Predicated region
        $region33: #{tpu_custom_call.1} parent=15 // pred_check
          %p287 = pneg %p159
        $region34: #{tpu_custom_call.1} parent=15 // pred_check_branch
          %289 = sbr.rel (%p287) target = $region36
        $region35: #{tpu_custom_call.1} parent=15 // pred_region
          %p290 = scmp.lt.s32.totalorder %s31, 9
          %s291 = scalar_select %p290, %s31, 9
          %s292 = scalar_lea.vmem %s4, %s291
        $region36: #{tpu_custom_call.1} parent=15 // pred_fallthru
          _
      $region16: #{tpu_custom_call.1} parent=5 // pred_fallthru
        _
      %p293 = scmp.le.s32.totalorder 1, %s23
      %p294 = scmp.lt.s32.totalorder %s23, 21
      %p295 = pnand %p293, %p294
      %p296 = pneg %p295
      // Predicated region
      $region37: #{tpu_custom_call.1} parent=5 // pred_check
        _
      $region38: #{tpu_custom_call.1} parent=5 // pred_check_branch
        %298 = sbr.rel (%p295) target = $region40
      $region39: #{tpu_custom_call.1} parent=5 // pred_region
        %s299 = ssub.s32 %s23, 1
        %s300 = sand.u32 %s48, 1
        %s301 = scalar_lea.sflag [#allocation4], %s300
        %s302 = sand.u32 %s48, 1
        %s303 = smul.addr %s302, 8
        %s304 = scalar_lea.vmem [#allocation3], %s303
        // Predicated region
        $region41: #{tpu_custom_call.1} parent=39 // pred_check
          %p305 = pneg %p61
        $region42: #{tpu_custom_call.1} parent=39 // pred_check_branch
          %307 = sbr.rel (%p305) target = $region44
        $region43: #{tpu_custom_call.1} parent=39 // pred_region
          %308 = dma.done %s301, 128
        $region44: #{tpu_custom_call.1} parent=39 // pred_fallthru
          _
        %s309 = sand.u32 %s28, 1
        %s310 = scalar_lea.sflag [#allocation7], %s309
        %s311 = sand.u32 %s74, 1
        %s312 = smul.addr %s311, 64
        %s313 = scalar_lea.vmem [#allocation6], %s312
        // Predicated region
        $region45: #{tpu_custom_call.1} parent=39 // pred_check
          %p314 = pneg %p87
        $region46: #{tpu_custom_call.1} parent=39 // pred_check_branch
          %316 = sbr.rel (%p314) target = $region48
        $region47: #{tpu_custom_call.1} parent=39 // pred_region
          %317 = dma.done %s310, 1024
        $region48: #{tpu_custom_call.1} parent=39 // pred_fallthru
          _
        %s318 = sand.u32 %s28, 1
        %s319 = scalar_lea.sflag [#allocation7], %s318
        %s320 = sand.u32 %s100, 1
        %s321 = scalar_lea.vmem [#allocation8], %s320
        // Predicated region
        $region49: #{tpu_custom_call.1} parent=39 // pred_check
          %p322 = pneg %p113
        $region50: #{tpu_custom_call.1} parent=39 // pred_check_branch
          %324 = sbr.rel (%p322) target = $region52
        $region51: #{tpu_custom_call.1} parent=39 // pred_region
          %325 = dma.done %s319, 16
        $region52: #{tpu_custom_call.1} parent=39 // pred_fallthru
          _
        %s326 = sand.u32 %s126, 1
        %s327 = scalar_lea.sflag [#allocation10], %s326
        %s328 = sand.u32 %s126, 1
        %s329 = smul.addr %s328, 64
        %s330 = scalar_lea.vmem [#allocation9], %s329
        // Predicated region
        $region53: #{tpu_custom_call.1} parent=39 // pred_check
          %p331 = pneg %p139
        $region54: #{tpu_custom_call.1} parent=39 // pred_check_branch
          %333 = sbr.rel (%p331) target = $region56
        $region55: #{tpu_custom_call.1} parent=39 // pred_region
          %334 = dma.done %s327, 1024
        $region56: #{tpu_custom_call.1} parent=39 // pred_fallthru
          _
        %s335 = sand.u32 %s48, 1
        %s336 = scalar_lea.sflag [#allocation4], %s335
        %s337 = sand.u32 %s48, 1
        %s338 = smul.addr %s337, 8
        %s339 = scalar_lea.vmem [#allocation3], %s338
        %p340 = pneg %p61
        %p341 = pneg %p58
        %s342 = sand.u32 %s28, 1
        %s343 = scalar_lea.sflag [#allocation7], %s342
        %s344 = sand.u32 %s74, 1
        %s345 = smul.addr %s344, 64
        %s346 = scalar_lea.vmem [#allocation6], %s345
        %p347 = pneg %p87
        %p348 = pneg %p84
        %s349 = sand.u32 %s28, 1
        %s350 = scalar_lea.sflag [#allocation7], %s349
        %s351 = sand.u32 %s100, 1
        %s352 = scalar_lea.vmem [#allocation8], %s351
        %p353 = pneg %p113
        %p354 = pneg %p110
        %s355 = sand.u32 %s126, 1
        %s356 = scalar_lea.sflag [#allocation10], %s355
        %s357 = sand.u32 %s126, 1
        %s358 = smul.addr %s357, 64
        %s359 = scalar_lea.vmem [#allocation9], %s358
        %p360 = pneg %p139
        %p361 = pneg %p136
        %p362 = scmp.lt.s32.totalorder %s33, 9
        %s363 = scalar_select %p362, %s33, 9
        %s364 = scalar_lea.vmem %s4, %s363
        %p365 = pneg %p165
        %p366 = pneg %p162
        %p367 = pneg %p191
        %p368 = pneg %p188
        %s369 = sand.u32 %s178, 1
        %s370 = scalar_lea.sflag [#allocation5], %s369
        %s371 = sand.u32 %s178, 1
        %s372 = smul.addr %s371, 8
        %s373 = scalar_lea.vmem [#allocation11], %s372
        %p374 = scmp.lt.s32.totalorder %s33, 9
        %s375 = scalar_select %p374, %s33, 9
        %s376 = scalar_lea.vmem %s4, %s375
        %p378 = scmp.eq.s32.totalorder %s33, 0
        // Predicated region
        $region57: #{tpu_custom_call.1} parent=39 // pred_check
          %p379 = pneg %p378
        $region58: #{tpu_custom_call.1} parent=39 // pred_check_branch
          %381 = sbr.rel (%p379) target = $region60
        $region59: #{tpu_custom_call.1} parent=39 // pred_region
          %v382 = vld [vmem:[%s304] sm:$0xff]
          %383 = vst [vmem:[#allocation2] sm:$0xff] %v382
        $region60: #{tpu_custom_call.1} parent=39 // pred_fallthru
          _
        %v384 = vld [vmem:[#allocation2] sm:$0xff]
        %v385 = vmax.f32 %v384, 0.0
        %v386 = vpack.c.bf16 %v385, %v385
        %v387 = vld [vmem:[%s313] sm:$0xf]
        %v388 = vld [vmem:[%s313 + $0x4] sm:$0xf]
        %v389 = vld [vmem:[%s313 + $0x8] sm:$0xf]
        %v390 = vld [vmem:[%s313 + $0xc] sm:$0xf]
        %v391 = vld [vmem:[%s313 + $0x10] sm:$0xf]
        %v392 = vld [vmem:[%s313 + $0x14] sm:$0xf]
        %v393 = vld [vmem:[%s313 + $0x18] sm:$0xf]
        %v394 = vld [vmem:[%s313 + $0x1c] sm:$0xf]
        %v395 = vld [vmem:[%s313 + $0x20] sm:$0xf]
        %v396 = vld [vmem:[%s313 + $0x24] sm:$0xf]
        %v397 = vld [vmem:[%s313 + $0x28] sm:$0xf]
        %v398 = vld [vmem:[%s313 + $0x2c] sm:$0xf]
        %v399 = vld [vmem:[%s313 + $0x30] sm:$0xf]
        %v400 = vld [vmem:[%s313 + $0x34] sm:$0xf]
        %v401 = vld [vmem:[%s313 + $0x38] sm:$0xf]
        %v402 = vld [vmem:[%s313 + $0x3c] sm:$0xf]
        %v403 = vld [vmem:[%s321] sm:$0x1]
        %v405 = vlaneseq
        %v406 = vshrl.u32 %v405, 7
        %v407 = vsub.s32 0, %v406
        %v408 = vrot.slane %v403, %v407
        %v426 = vunpack.c.l.b16 %v387
        %v427 = vunpack.c.l.b16 %v388
        %v428 = vunpack.c.l.b16 %v389
        %v429 = vunpack.c.l.b16 %v390
        %v430 = vunpack.c.l.b16 %v391
        %v431 = vunpack.c.l.b16 %v392
        %v432 = vunpack.c.l.b16 %v393
        %v433 = vunpack.c.l.b16 %v394
        %v434 = vunpack.c.l.b16 %v395
        %v435 = vunpack.c.l.b16 %v396
        %v436 = vunpack.c.l.b16 %v397
        %v437 = vunpack.c.l.b16 %v398
        %v438 = vunpack.c.l.b16 %v399
        %v439 = vunpack.c.l.b16 %v400
        %v440 = vunpack.c.l.b16 %v401
        %v441 = vunpack.c.l.b16 %v402
        %v442 = vpack.c.b16 %v427, %v426
        %v443 = vpack.c.b16 %v429, %v428
        %v444 = vpack.c.b16 %v431, %v430
        %v445 = vpack.c.b16 %v433, %v432
        %v446 = vpack.c.b16 %v435, %v434
        %v447 = vpack.c.b16 %v437, %v436
        %v448 = vpack.c.b16 %v439, %v438
        %v449 = vpack.c.b16 %v441, %v440
        %458 = vmatprep.subr.bf16.mxu0 0
        %459 = vmatpush1.bf16.msra.mxu0 %v442
        %460 = vmatprep.subr.bf16.mxu0 0
        %461 = vmatpush1.bf16.msra.mxu0 %v443
        %462 = vmatprep.subr.bf16.mxu0 0
        %463 = vmatpush1.bf16.msra.mxu0 %v444
        %464 = vmatprep.subr.bf16.mxu0 0
        %465 = vmatpush1.bf16.msra.mxu0 %v445
        %466 = vmatprep.subr.bf16.mxu0 0
        %467 = vmatpush1.bf16.msra.mxu0 %v446
        %468 = vmatprep.subr.bf16.mxu0 0
        %469 = vmatpush1.bf16.msra.mxu0 %v447
        %470 = vmatprep.subr.bf16.mxu0 0
        %471 = vmatpush1.bf16.msra.mxu0 %v448
        %472 = vmatprep.subr.bf16.mxu0 0
        %473 = vmatpush1.bf16.msra.mxu0 %v449
        %474 = vmatprep.subr.bf16.mxu0 0
        %475 = vmatpush1.bf16.msra.mxu0 0
        %476 = vmatprep.subr.bf16.mxu0 0
        %477 = vmatpush1.bf16.msra.mxu0 0
        %478 = vmatprep.subr.bf16.mxu0 0
        %479 = vmatpush1.bf16.msra.mxu0 0
        %480 = vmatprep.subr.bf16.mxu0 0
        %481 = vmatpush1.bf16.msra.mxu0 0
        %482 = vmatprep.subr.bf16.mxu0 0
        %483 = vmatpush1.bf16.msra.mxu0 0
        %484 = vmatprep.subr.bf16.mxu0 0
        %485 = vmatpush1.bf16.msra.mxu0 0
        %486 = vmatprep.subr.bf16.mxu0 0
        %487 = vmatpush1.bf16.msra.mxu0 0
        %488 = vmatprep.subr.bf16.mxu0 0
        %489 = vmatpush1.bf16.msra.mxu0 0
        %490 = vmatprep.mubr.bf16.mxu0 0
        %491 = vmatmul.mubr.bf16.gmra.mrb[0].mxu0 %v386
        %v492 = vpop.f32.mrb[0].mxu0
        %v493 = vadd.f32 %v408, %v492
        %v494 = vpop.f32.mrb[0].mxu0
        %v495 = vpop.f32.mrb[0].mxu0
        %v496 = vpop.f32.mrb[0].mxu0
        %497 = vdwg.mxu0
        %v498 = vpack.c.bf16 %v493, %v493
        %v499 = vld [vmem:[%s330] sm:$0xf]
        %v500 = vld [vmem:[%s330 + $0x4] sm:$0xf]
        %v501 = vld [vmem:[%s330 + $0x8] sm:$0xf]
        %v502 = vld [vmem:[%s330 + $0xc] sm:$0xf]
        %v503 = vld [vmem:[%s330 + $0x10] sm:$0xf]
        %v504 = vld [vmem:[%s330 + $0x14] sm:$0xf]
        %v505 = vld [vmem:[%s330 + $0x18] sm:$0xf]
        %v506 = vld [vmem:[%s330 + $0x1c] sm:$0xf]
        %v507 = vld [vmem:[%s330 + $0x20] sm:$0xf]
        %v508 = vld [vmem:[%s330 + $0x24] sm:$0xf]
        %v509 = vld [vmem:[%s330 + $0x28] sm:$0xf]
        %v510 = vld [vmem:[%s330 + $0x2c] sm:$0xf]
        %v511 = vld [vmem:[%s330 + $0x30] sm:$0xf]
        %v512 = vld [vmem:[%s330 + $0x34] sm:$0xf]
        %v513 = vld [vmem:[%s330 + $0x38] sm:$0xf]
        %v514 = vld [vmem:[%s330 + $0x3c] sm:$0xf]
        %v515 = vld [vmem:[%s376] sm:$0x1]
        %v517 = vlaneseq
        %v518 = vshrl.u32 %v517, 7
        %v519 = vsub.s32 0, %v518
        %v520 = vrot.slane %v515, %v519
        %v538 = vunpack.c.l.b16 %v499
        %v539 = vunpack.c.l.b16 %v500
        %v540 = vunpack.c.l.b16 %v501
        %v541 = vunpack.c.l.b16 %v502
        %v542 = vunpack.c.l.b16 %v503
        %v543 = vunpack.c.l.b16 %v504
        %v544 = vunpack.c.l.b16 %v505
        %v545 = vunpack.c.l.b16 %v506
        %v546 = vunpack.c.l.b16 %v507
        %v547 = vunpack.c.l.b16 %v508
        %v548 = vunpack.c.l.b16 %v509
        %v549 = vunpack.c.l.b16 %v510
        %v550 = vunpack.c.l.b16 %v511
        %v551 = vunpack.c.l.b16 %v512
        %v552 = vunpack.c.l.b16 %v513
        %v553 = vunpack.c.l.b16 %v514
        %v554 = vpack.c.b16 %v539, %v538
        %v555 = vpack.c.b16 %v541, %v540
        %v556 = vpack.c.b16 %v543, %v542
        %v557 = vpack.c.b16 %v545, %v544
        %v558 = vpack.c.b16 %v547, %v546
        %v559 = vpack.c.b16 %v549, %v548
        %v560 = vpack.c.b16 %v551, %v550
        %v561 = vpack.c.b16 %v553, %v552
        %570 = vmatprep.subr.bf16.mxu0 0
        %571 = vmatpush1.bf16.msra.mxu0 %v554
        %572 = vmatprep.subr.bf16.mxu0 0
        %573 = vmatpush1.bf16.msra.mxu0 %v555
        %574 = vmatprep.subr.bf16.mxu0 0
        %575 = vmatpush1.bf16.msra.mxu0 %v556
        %576 = vmatprep.subr.bf16.mxu0 0
        %577 = vmatpush1.bf16.msra.mxu0 %v557
        %578 = vmatprep.subr.bf16.mxu0 0
        %579 = vmatpush1.bf16.msra.mxu0 %v558
        %580 = vmatprep.subr.bf16.mxu0 0
        %581 = vmatpush1.bf16.msra.mxu0 %v559
        %582 = vmatprep.subr.bf16.mxu0 0
        %583 = vmatpush1.bf16.msra.mxu0 %v560
        %584 = vmatprep.subr.bf16.mxu0 0
        %585 = vmatpush1.bf16.msra.mxu0 %v561
        %586 = vmatprep.subr.bf16.mxu0 0
        %587 = vmatpush1.bf16.msra.mxu0 0
        %588 = vmatprep.subr.bf16.mxu0 0
        %589 = vmatpush1.bf16.msra.mxu0 0
        %590 = vmatprep.subr.bf16.mxu0 0
        %591 = vmatpush1.bf16.msra.mxu0 0
        %592 = vmatprep.subr.bf16.mxu0 0
        %593 = vmatpush1.bf16.msra.mxu0 0
        %594 = vmatprep.subr.bf16.mxu0 0
        %595 = vmatpush1.bf16.msra.mxu0 0
        %596 = vmatprep.subr.bf16.mxu0 0
        %597 = vmatpush1.bf16.msra.mxu0 0
        %598 = vmatprep.subr.bf16.mxu0 0
        %599 = vmatpush1.bf16.msra.mxu0 0
        %600 = vmatprep.subr.bf16.mxu0 0
        %601 = vmatpush1.bf16.msra.mxu0 0
        %602 = vmatprep.mubr.bf16.mxu0 0
        %603 = vmatmul.mubr.bf16.gmra.mrb[0].mxu0 %v498
        %v604 = vpop.f32.mrb[0].mxu0
        %v605 = vadd.f32 %v520, %v604
        %v606 = vpop.f32.mrb[0].mxu0
        %v607 = vpop.f32.mrb[0].mxu0
        %v608 = vpop.f32.mrb[0].mxu0
        %609 = vdwg.mxu0
        %610 = vst [vmem:[#allocation2] sm:$0xff] %v605
        %p611 = scmp.eq.s32.totalorder %s33, 9
        // Predicated region
        $region61: #{tpu_custom_call.1} parent=39 // pred_check
          %p612 = pneg %p611
        $region62: #{tpu_custom_call.1} parent=39 // pred_check_branch
          %614 = sbr.rel (%p612) target = $region64
        $region63: #{tpu_custom_call.1} parent=39 // pred_region
          %615 = vst [vmem:[%s373] sm:$0xff] %v605
        $region64: #{tpu_custom_call.1} parent=39 // pred_fallthru
          _
        %s616 = sand.u32 %s178, 1
        %s617 = scalar_lea.sflag [#allocation5], %s616
        %s618 = sand.u32 %s178, 1
        %s619 = smul.addr %s618, 8
        %s620 = scalar_lea.vmem [#allocation11], %s619
        // Predicated region
        $region65: #{tpu_custom_call.1} parent=39 // pred_check
          %p621 = pneg %p188
        $region66: #{tpu_custom_call.1} parent=39 // pred_check_branch
          %623 = sbr.rel (%p621) target = $region68
        $region67: #{tpu_custom_call.1} parent=39 // pred_region
          %s625 = ssub.s32 128, 128
          %626 = vsyncadd %s617, %s625
          %s627 = smul.addr %s32, 128
          %s628 = scalar_lea.hbm %s5, %s627
          %s630 = sshll.u32 %s620, 4
          %s631 = int_to_ptr.vmem [resolvable:$true] %s630
          %633 = dma.vmem_to_hbm [thread:$0]  %s631, 128, %s628, %s617
        $region68: #{tpu_custom_call.1} parent=39 // pred_fallthru
          _
      $region40: #{tpu_custom_call.1} parent=5 // pred_fallthru
        _
      %p634 = scmp.le.s32.totalorder 2, %s23
      // Predicated region
      $region69: #{tpu_custom_call.1} parent=5 // pred_check
        %p635 = pneg %p634
      $region70: #{tpu_custom_call.1} parent=5 // pred_check_branch
        %637 = sbr.rel (%p635) target = $region72
      $region71: #{tpu_custom_call.1} parent=5 // pred_region
        %s638 = ssub.s32 %s23, 2
        // Predicated region
        $region73: #{tpu_custom_call.1} parent=71 // pred_check
          %p639 = pneg %p194
        $region74: #{tpu_custom_call.1} parent=71 // pred_check_branch
          %641 = sbr.rel (%p639) target = $region76
        $region75: #{tpu_custom_call.1} parent=71 // pred_region
          %s642 = sand.u32 %s179, 1
          %s643 = scalar_lea.sflag [#allocation5], %s642
          %s644 = sand.u32 %s179, 1
          %s645 = smul.addr %s644, 8
          %s646 = scalar_lea.vmem [#allocation11], %s645
          %647 = dma.done %s643, 128
        $region76: #{tpu_custom_call.1} parent=71 // pred_fallthru
          _
      $region72: #{tpu_custom_call.1} parent=5 // pred_fallthru
        _
    $region6: #{tpu_custom_call.1} parent=1 // loop_footer
      %s27 = sadd.s32 1, %s23
    $region7: #{tpu_custom_call.1} parent=1 // loop_footer_branch
      %22 = sbr.rel target = $region3
    $region8: #{tpu_custom_call.1} parent=1 // loop_exit
      _
    %648 = vsyncpa [#allocation4], 1
    %s649 = scalar_lea.sflag [#allocation4], 1
    %650 = vsyncpa %s649, 1
    %651 = vsyncpa [#allocation7], 1
    %s652 = scalar_lea.sflag [#allocation7], 1
    %653 = vsyncpa %s652, 1
    %654 = vsyncpa [#allocation10], 1
    %s655 = scalar_lea.sflag [#allocation10], 1
    %656 = vsyncpa %s655, 1
    %657 = vsyncpa [#allocation5], 1
    %s658 = scalar_lea.sflag [#allocation5], 1
    %659 = vsyncpa %s658, 1

</llo_original>
